<compile_context>
chip_gen: v7x
topology: tpu7x:2x2x1
jax: 0.10.0
libtpu: 0.0.40
codegen_flags: <defaults>
</compile_context>

<pallas_src>
import functools
import math

import jax
import jax.numpy as jnp
from jax.experimental import pallas as pl
from jax.experimental.pallas import tpu as pltpu


def _downsample_a_kernel(sel_ref, x_ref, o_ref, *, acc_dtype):
    # sel_ref: (G*2W, G*Wo)  block-diagonal one-hot lane de-interleave
    # x_ref:   (BR,  G*2W)   BR packed rows; each row = G (h-even | h-odd) pairs
    # o_ref:   (BR,  G*Wo)   subsampled rows, lane-dense
    o_ref[...] = jnp.dot(
        x_ref[...], sel_ref[...],
        preferred_element_type=acc_dtype).astype(o_ref.dtype)


def _pick_group(R, W, Wo, itemsize, max_sel_bytes=2 << 20):
    """Smallest G dividing R with (G*Wo) % 128 == 0 and a small selector."""
    g0 = 128 // math.gcd(Wo, 128)  # smallest G with lane-dense output

    def sel_bytes(g):
        return (g * 2 * W) * (g * Wo) * itemsize

    hi = min(R, max(8 * g0, 256))
    divs = [d for d in range(1, hi + 1) if R % d == 0]
    lane_dense = [d for d in divs
                  if (d * Wo) % 128 == 0 and sel_bytes(d) <= max_sel_bytes]
    if lane_dense:
        return min(lane_dense)
    ok = [d for d in divs if d <= g0 and sel_bytes(d) <= max_sel_bytes]
    return max(ok) if ok else 1


def _pick_block_rows(rs, lanes_in, itemsize, max_bytes=4 << 20):
    """8-aligned row-chunk size, <= ~4 MiB per input buffer, >=2 grid steps."""
    if rs <= 8:
        return rs
    cap = max(8, min(rs, max_bytes // max(1, lanes_in * itemsize), 1024))
    br = (cap // 8) * 8
    if br >= rs:
        # split so at least two grid steps exist (keeps both v7x TCs busy)
        br = max(8, ((rs // 2) // 8) * 8)
    return br


def downsample_a(x, stride=2):
    assert stride == 2, "DownsampleA requires stride == 2"
    N, C, H, W = x.shape
    # TODO(synk): odd H/W (PyTorch gives ceil(H/2)) is not handled by the
    # row-pair reshape fast path; ResNet uses of DownsampleA have even H/W.
    assert H % 2 == 0 and W % 2 == 0, "fast path requires even spatial dims"
    # TODO(synk): integer dtypes would need a VPU-select path (v7x MXU is
    # float-only); the module is only used on float activations.
    assert jnp.issubdtype(x.dtype, jnp.floating), "float input required"

    Ho, Wo = H // 2, W // 2
    R = N * C * Ho                         # total (n, c, h-pair) rows
    isz = jnp.dtype(x.dtype).itemsize

    G = _pick_group(R, W, Wo, isz)         # rows packed per matmul row
    Rs = R // G
    lanes_in = G * 2 * W
    lanes_out = G * Wo

    # Contiguous (free) reshape: each packed row = G consecutive 2W-wide
    # (h-even | h-odd) row pairs.
    x2 = x.reshape(Rs, lanes_in)

    # Block-diagonal one-hot selector in the input dtype.
    ri = jnp.arange(lanes_in)
    ci = jnp.arange(lanes_out)
    sel = ((ri[:, None] // (2 * W) == ci[None, :] // Wo)
           & (ri[:, None] % (2 * W) == 2 * (ci[None, :] % Wo))).astype(x.dtype)

    BR = _pick_block_rows(Rs, lanes_in, isz)
    grid = (pl.cdiv(Rs, BR),)

    acc_dtype = x.dtype if x.dtype == jnp.bfloat16 else jnp.float32
    kernel = functools.partial(_downsample_a_kernel, acc_dtype=acc_dtype)

    sub2 = pl.pallas_call(
        kernel,
        out_shape=jax.ShapeDtypeStruct((Rs, lanes_out), x.dtype),
        grid=grid,
        in_specs=[
            pl.BlockSpec((lanes_in, lanes_out), lambda i: (0, 0)),  # selector
            pl.BlockSpec((BR, lanes_in), lambda i: (i, 0)),         # row chunk
        ],
        out_specs=pl.BlockSpec((BR, lanes_out), lambda i: (i, 0)),
        compiler_params=pltpu.CompilerParams(
            dimension_semantics=("parallel",),
            vmem_limit_bytes=32 * 1024 * 1024),
        cost_estimate=pl.CostEstimate(
            flops=2 * Rs * lanes_in * lanes_out,       # MXU work actually issued
            transcendentals=0,
            bytes_accessed=(R * 2 * W + sel.size + R * Wo) * isz),
    )(sel, x2)

    # Contiguous (free) reshape back; zero channels stay outside the kernel so
    # XLA can fold them into downstream consumers.
    sub = sub2.reshape(N, C, Ho, Wo)
    return jnp.concatenate([sub, jnp.zeros_like(sub)], axis=1)


if __name__ == "__main__":
    key = jax.random.PRNGKey(0)
    N, C, H, W = 2, 4, 16, 16          # nIn=4 (nOut unused by forward), stride=2
    x = jax.random.normal(key, (N, C, H, W), dtype=jnp.float32)

    out = downsample_a(x, stride=2)
    out = jax.block_until_ready(out)

    # Pure-JAX reference.
    sub_ref = x[:, :, ::2, ::2]
    ref = jnp.concatenate([sub_ref, jnp.zeros_like(sub_ref)], axis=1)

    assert out.shape == (N, 2 * C, H // 2, W // 2), out.shape
    assert jnp.allclose(out, ref, atol=0.0, rtol=0.0), "mismatch vs reference"

    print("KERNEL_OK")
</pallas_src>

<mosaic_0001>
module attributes {stable_mosaic.version = 11 : i64} {
  func.func @_downsample_a_kernel(%arg0: i32, %arg1: memref<512x128xf32, #tpu.memory_space<vmem>>, %arg2: memref<4x512xf32, #tpu.memory_space<vmem>>, %arg3: memref<4x128xf32, #tpu.memory_space<vmem>>) attributes {dimension_semantics = [#tpu.dimension_semantics<parallel>], iteration_bounds = array<i64: 1>, scalar_prefetch = 0 : i64, scratch_operands = 0 : i64, tpu.core_type = #tpu.core_type<tc>, window_params = [{pipeline_mode = #tpu.pipeline_mode<synchronous>, transform_indices = @transform_0, window_bounds = array<i64: 512, 128>}, {transform_indices = @transform_1, window_bounds = array<i64: 4, 512>}, {transform_indices = @transform_2, window_bounds = array<i64: 4, 128>}]} {
    %c0 = arith.constant 0 : index
    %c0_0 = arith.constant 0 : index
    %0 = vector.load %arg2[%c0, %c0_0] : memref<4x512xf32, #tpu.memory_space<vmem>>, vector<4x512xf32>
    %c0_1 = arith.constant 0 : index
    %c0_2 = arith.constant 0 : index
    %1 = vector.load %arg1[%c0_1, %c0_2] : memref<512x128xf32, #tpu.memory_space<vmem>>, vector<512x128xf32>
    %cst = arith.constant dense<0.000000e+00> : vector<4x128xf32>
    %2 = tpu.matmul %0, %1, %cst {dimension_numbers = #tpu.dot_dimension_numbers<[1], [0], [0], [1], [0, 0, 1, 1], [], []>} : vector<4x512xf32>, vector<512x128xf32>, vector<4x128xf32> -> vector<4x128xf32>
    %c0_3 = arith.constant 0 : index
    %c0_4 = arith.constant 0 : index
    %3 = vector.load %arg3[%c0_3, %c0_4] : memref<4x128xf32, #tpu.memory_space<vmem>>, vector<4x128xf32>
    tpu.vector_store %arg3[%c0_3, %c0_4], %2 {strides = array<i32>} : memref<4x128xf32, #tpu.memory_space<vmem>>, vector<4x128xf32>,
    return
  }
  func.func @transform_0(%arg0: i32) -> (i32, i32) {
    %c0_i32 = arith.constant 0 : i32
    %c0_i32_0 = arith.constant 0 : i32
    %c0_i32_1 = arith.constant 0 : i32
    return %c0_i32, %c0_i32_0 : i32, i32
  }
  func.func @transform_1(%arg0: i32) -> (i32, i32) {
    %c0_i32 = arith.constant 0 : i32
    %c0_i32_0 = arith.constant 0 : i32
    return %arg0, %c0_i32 : i32, i32
  }
  func.func @transform_2(%arg0: i32) -> (i32, i32) {
    %c0_i32 = arith.constant 0 : i32
    %c0_i32_0 = arith.constant 0 : i32
    return %arg0, %c0_i32 : i32, i32
  }
}

</mosaic_0001>

<llo_original>
// kernel: tpu_custom_call.1
$region0: #{tpu_custom_call.1}
  #allocation0 [shape = 'u32[]', space=smem, size = 0x4, offset = 0x4, fixed_abs, tag = 'smem constant byte address 0x4 - core index']
  #allocation1 [shape = 'u32[144,128]{1,0:T(1,128)}', space=vmem, size = 0x12000, scoped, tag = 'internal scratch']
  %s0 = inlined_call_operand.hbm [shape: f32[512,128], index: 0, kind: input, shape index: {}]
  %s1 = inlined_call_operand.hbm [shape: f32[4,512], index: 1, kind: input, shape index: {}]
  %s2 = inlined_call_operand.hbm [shape: f32[4,128], index: 2, kind: output, shape index: {}]
  %s3 = sld [smem:[#allocation0]]
  $region26: #{tpu_custom_call.1} parent=0
    _
  %s5 = ssub.s32 1, %s3
  %s6 = scalar_select 0, %s5, %s3
  $region1: #{tpu_custom_call.1} parent=0
    #allocation2 [shape = 'u8[262144]{0}', space=vmem, size = 0x40000, scoped, tag = 'input window, operand 0, single buffered']
    #allocation3 [shape = 's32[1]{0}', space=sflag, size = 0x4, scoped, tag = 'scoped memory for tpu_custom_call.1']
    #allocation4 [shape = 's32[1]{0}', space=sflag, size = 0x4, scoped, tag = 'scoped memory for tpu_custom_call.1']
    #allocation5 [shape = 'u8[8192]{0}', space=vmem, size = 0x2000, scoped, tag = 'input window, operand 1, single buffered']
    #allocation6 [shape = 's32[1]{0}', space=sflag, size = 0x4, scoped, tag = 'scoped memory for tpu_custom_call.1']
    #allocation7 [shape = 'u8[2048]{0}', space=vmem, size = 0x800, scoped, tag = 'output window, operand 0, single buffered']
    %7 = vsyncpa [#allocation3], 0
    %8 = vsyncpa [#allocation6], 0
    %9 = vsyncpa [#allocation4], 0
    // Predicated region
    $region2: #{tpu_custom_call.1} parent=1 // pred_check
      _
    $region3: #{tpu_custom_call.1} parent=1 // pred_check_branch
      %11 = sbr.rel (0) target = $region5
    $region4: #{tpu_custom_call.1} parent=1 // pred_region
      %s13 = ssub.s32 8192, 8192
      %14 = vsyncadd [#allocation3], %s13
      %s15 = sshll.u32 [#allocation2], 4
      %s16 = int_to_ptr.vmem [resolvable:$true] %s15
      %21 = dma.hbm_to_vmem [thread:$0]  %s0, 8192, %s16, [#allocation3], 128, 128, 8
    $region5: #{tpu_custom_call.1} parent=1 // pred_fallthru
      _
    // Predicated region
    $region6: #{tpu_custom_call.1} parent=1 // pred_check
      _
    $region7: #{tpu_custom_call.1} parent=1 // pred_check_branch
      %23 = sbr.rel (0) target = $region9
    $region8: #{tpu_custom_call.1} parent=1 // pred_region
      %s25 = ssub.s32 256, 256
      %26 = vsyncadd [#allocation6], %s25
      %s28 = sshll.u32 [#allocation5], 4
      %s29 = int_to_ptr.vmem [resolvable:$true] %s28
      %31 = dma.hbm_to_vmem [thread:$0]  %s1, 256, %s29, [#allocation6]
    $region9: #{tpu_custom_call.1} parent=1 // pred_fallthru
      _
    // Predicated region
    $region10: #{tpu_custom_call.1} parent=1 // pred_check
      _
    $region11: #{tpu_custom_call.1} parent=1 // pred_check_branch
      %33 = sbr.rel (0) target = $region13
    $region12: #{tpu_custom_call.1} parent=1 // pred_region
      %34 = dma.done [#allocation3], 8192
    $region13: #{tpu_custom_call.1} parent=1 // pred_fallthru
      _
    // Predicated region
    $region14: #{tpu_custom_call.1} parent=1 // pred_check
      _
    $region15: #{tpu_custom_call.1} parent=1 // pred_check_branch
      %36 = sbr.rel (0) target = $region17
    $region16: #{tpu_custom_call.1} parent=1 // pred_region
      %37 = dma.done [#allocation6], 256
    $region17: #{tpu_custom_call.1} parent=1 // pred_fallthru
      _
    %v38 = vld [vmem:[#allocation5] sm:$0xff]
    %v39 = vld [vmem:[#allocation5 + $0x8] sm:$0xff]
    %v40 = vld [vmem:[#allocation2] sm:$0xff]
    %v41 = vld [vmem:[#allocation2 + $0x8] sm:$0xff]
    %v42 = vld [vmem:[#allocation2 + $0x10] sm:$0xff]
    %v43 = vld [vmem:[#allocation2 + $0x18] sm:$0xff]
    %v44 = vld [vmem:[#allocation2 + $0x20] sm:$0xff]
    %v45 = vld [vmem:[#allocation2 + $0x28] sm:$0xff]
    %v46 = vld [vmem:[#allocation2 + $0x30] sm:$0xff]
    %v47 = vld [vmem:[#allocation2 + $0x38] sm:$0xff]
    %v48 = vld [vmem:[#allocation2 + $0x40] sm:$0xff]
    %v49 = vld [vmem:[#allocation2 + $0x48] sm:$0xff]
    %v50 = vld [vmem:[#allocation2 + $0x50] sm:$0xff]
    %v51 = vld [vmem:[#allocation2 + $0x58] sm:$0xff]
    %v52 = vld [vmem:[#allocation2 + $0x60] sm:$0xff]
    %v53 = vld [vmem:[#allocation2 + $0x68] sm:$0xff]
    %v54 = vld [vmem:[#allocation2 + $0x70] sm:$0xff]
    %v55 = vld [vmem:[#allocation2 + $0x78] sm:$0xff]
    %v56 = vld [vmem:[#allocation2 + $0x80] sm:$0xff]
    %v57 = vld [vmem:[#allocation2 + $0x88] sm:$0xff]
    %v58 = vld [vmem:[#allocation2 + $0x90] sm:$0xff]
    %v59 = vld [vmem:[#allocation2 + $0x98] sm:$0xff]
    %v60 = vld [vmem:[#allocation2 + $0xa0] sm:$0xff]
    %v61 = vld [vmem:[#allocation2 + $0xa8] sm:$0xff]
    %v62 = vld [vmem:[#allocation2 + $0xb0] sm:$0xff]
    %v63 = vld [vmem:[#allocation2 + $0xb8] sm:$0xff]
    %v64 = vld [vmem:[#allocation2 + $0xc0] sm:$0xff]
    %v65 = vld [vmem:[#allocation2 + $0xc8] sm:$0xff]
    %v66 = vld [vmem:[#allocation2 + $0xd0] sm:$0xff]
    %v67 = vld [vmem:[#allocation2 + $0xd8] sm:$0xff]
    %v68 = vld [vmem:[#allocation2 + $0xe0] sm:$0xff]
    %v69 = vld [vmem:[#allocation2 + $0xe8] sm:$0xff]
    %v70 = vld [vmem:[#allocation2 + $0xf0] sm:$0xff]
    %v71 = vld [vmem:[#allocation2 + $0xf8] sm:$0xff]
    %v72 = vld [vmem:[#allocation2 + $0x100] sm:$0xff]
    %v73 = vld [vmem:[#allocation2 + $0x108] sm:$0xff]
    %v74 = vld [vmem:[#allocation2 + $0x110] sm:$0xff]
    %v75 = vld [vmem:[#allocation2 + $0x118] sm:$0xff]
    %v76 = vld [vmem:[#allocation2 + $0x120] sm:$0xff]
    %v77 = vld [vmem:[#allocation2 + $0x128] sm:$0xff]
    %v78 = vld [vmem:[#allocation2 + $0x130] sm:$0xff]
    %v79 = vld [vmem:[#allocation2 + $0x138] sm:$0xff]
    %v80 = vld [vmem:[#allocation2 + $0x140] sm:$0xff]
    %v81 = vld [vmem:[#allocation2 + $0x148] sm:$0xff]
    %v82 = vld [vmem:[#allocation2 + $0x150] sm:$0xff]
    %v83 = vld [vmem:[#allocation2 + $0x158] sm:$0xff]
    %v84 = vld [vmem:[#allocation2 + $0x160] sm:$0xff]
    %v85 = vld [vmem:[#allocation2 + $0x168] sm:$0xff]
    %v86 = vld [vmem:[#allocation2 + $0x170] sm:$0xff]
    %v87 = vld [vmem:[#allocation2 + $0x178] sm:$0xff]
    %v88 = vld [vmem:[#allocation2 + $0x180] sm:$0xff]
    %v89 = vld [vmem:[#allocation2 + $0x188] sm:$0xff]
    %v90 = vld [vmem:[#allocation2 + $0x190] sm:$0xff]
    %v91 = vld [vmem:[#allocation2 + $0x198] sm:$0xff]
    %v92 = vld [vmem:[#allocation2 + $0x1a0] sm:$0xff]
    %v93 = vld [vmem:[#allocation2 + $0x1a8] sm:$0xff]
    %v94 = vld [vmem:[#allocation2 + $0x1b0] sm:$0xff]
    %v95 = vld [vmem:[#allocation2 + $0x1b8] sm:$0xff]
    %v96 = vld [vmem:[#allocation2 + $0x1c0] sm:$0xff]
    %v97 = vld [vmem:[#allocation2 + $0x1c8] sm:$0xff]
    %v98 = vld [vmem:[#allocation2 + $0x1d0] sm:$0xff]
    %v99 = vld [vmem:[#allocation2 + $0x1d8] sm:$0xff]
    %v100 = vld [vmem:[#allocation2 + $0x1e0] sm:$0xff]
    %v101 = vld [vmem:[#allocation2 + $0x1e8] sm:$0xff]
    %v102 = vld [vmem:[#allocation2 + $0x1f0] sm:$0xff]
    %v103 = vld [vmem:[#allocation2 + $0x1f8] sm:$0xff]
    %v106 = vcombine.high %v38, %v38
    %v107 = vcombine.high %v39, %v39
    %110 = vmatprep.subr.mxu0 0.0
    %111 = vmatpush1.msra.mxu0 %v40
    %112 = vmatprep.subr.mxu0 0.0
    %113 = vmatpush1.msra.mxu0 %v41
    %114 = vmatprep.subr.mxu0 0.0
    %115 = vmatpush1.msra.mxu0 %v42
    %116 = vmatprep.subr.mxu0 0.0
    %117 = vmatpush1.msra.mxu0 %v43
    %118 = vmatprep.subr.mxu0 0.0
    %119 = vmatpush1.msra.mxu0 %v44
    %120 = vmatprep.subr.mxu0 0.0
    %121 = vmatpush1.msra.mxu0 %v45
    %122 = vmatprep.subr.mxu0 0.0
    %123 = vmatpush1.msra.mxu0 %v46
    %124 = vmatprep.subr.mxu0 0.0
    %125 = vmatpush1.msra.mxu0 %v47
    %126 = vmatprep.subr.mxu0 0.0
    %127 = vmatpush1.msra.mxu0 %v48
    %128 = vmatprep.subr.mxu0 0.0
    %129 = vmatpush1.msra.mxu0 %v49
    %130 = vmatprep.subr.mxu0 0.0
    %131 = vmatpush1.msra.mxu0 %v50
    %132 = vmatprep.subr.mxu0 0.0
    %133 = vmatpush1.msra.mxu0 %v51
    %134 = vmatprep.subr.mxu0 0.0
    %135 = vmatpush1.msra.mxu0 %v52
    %136 = vmatprep.subr.mxu0 0.0
    %137 = vmatpush1.msra.mxu0 %v53
    %138 = vmatprep.subr.mxu0 0.0
    %139 = vmatpush1.msra.mxu0 %v54
    %140 = vmatprep.subr.mxu0 0.0
    %141 = vmatpush1.msra.mxu0 %v55
    %142 = vmatprep.subr.mxu0 0.0
    %143 = vmatpush1.msra.mxu0 %v56
    %144 = vmatprep.subr.mxu0 0.0
    %145 = vmatpush1.msra.mxu0 %v57
    %146 = vmatprep.subr.mxu0 0.0
    %147 = vmatpush1.msra.mxu0 %v58
    %148 = vmatprep.subr.mxu0 0.0
    %149 = vmatpush1.msra.mxu0 %v59
    %150 = vmatprep.subr.mxu0 0.0
    %151 = vmatpush1.msra.mxu0 %v60
    %152 = vmatprep.subr.mxu0 0.0
    %153 = vmatpush1.msra.mxu0 %v61
    %154 = vmatprep.subr.mxu0 0.0
    %155 = vmatpush1.msra.mxu0 %v62
    %156 = vmatprep.subr.mxu0 0.0
    %157 = vmatpush1.msra.mxu0 %v63
    %158 = vmatprep.subr.mxu0 0.0
    %159 = vmatpush1.msra.mxu0 %v64
    %160 = vmatprep.subr.mxu0 0.0
    %161 = vmatpush1.msra.mxu0 %v65
    %162 = vmatprep.subr.mxu0 0.0
    %163 = vmatpush1.msra.mxu0 %v66
    %164 = vmatprep.subr.mxu0 0.0
    %165 = vmatpush1.msra.mxu0 %v67
    %166 = vmatprep.subr.mxu0 0.0
    %167 = vmatpush1.msra.mxu0 %v68
    %168 = vmatprep.subr.mxu0 0.0
    %169 = vmatpush1.msra.mxu0 %v69
    %170 = vmatprep.subr.mxu0 0.0
    %171 = vmatpush1.msra.mxu0 %v70
    %172 = vmatprep.subr.mxu0 0.0
    %173 = vmatpush1.msra.mxu0 %v71
    %174 = vmatprep.mubr.f32.mxu0 %v106
    %175 = vmatmul.mubr.f32.gmra.mrb[0].mxu0 %v38
    %v176 = vpop.f32.mrb[0].mxu0
    %v177 = vadd.f32 0.0, %v176
    %v178 = vpop.f32.mrb[0].mxu0
    %179 = vdwg.mxu0
    %180 = vmatprep.subr.mxu0 0.0
    %181 = vmatpush1.msra.mxu0 %v72
    %182 = vmatprep.subr.mxu0 0.0
    %183 = vmatpush1.msra.mxu0 %v73
    %184 = vmatprep.subr.mxu0 0.0
    %185 = vmatpush1.msra.mxu0 %v74
    %186 = vmatprep.subr.mxu0 0.0
    %187 = vmatpush1.msra.mxu0 %v75
    %188 = vmatprep.subr.mxu0 0.0
    %189 = vmatpush1.msra.mxu0 %v76
    %190 = vmatprep.subr.mxu0 0.0
    %191 = vmatpush1.msra.mxu0 %v77
    %192 = vmatprep.subr.mxu0 0.0
    %193 = vmatpush1.msra.mxu0 %v78
    %194 = vmatprep.subr.mxu0 0.0
    %195 = vmatpush1.msra.mxu0 %v79
    %196 = vmatprep.subr.mxu0 0.0
    %197 = vmatpush1.msra.mxu0 %v80
    %198 = vmatprep.subr.mxu0 0.0
    %199 = vmatpush1.msra.mxu0 %v81
    %200 = vmatprep.subr.mxu0 0.0
    %201 = vmatpush1.msra.mxu0 %v82
    %202 = vmatprep.subr.mxu0 0.0
    %203 = vmatpush1.msra.mxu0 %v83
    %204 = vmatprep.subr.mxu0 0.0
    %205 = vmatpush1.msra.mxu0 %v84
    %206 = vmatprep.subr.mxu0 0.0
    %207 = vmatpush1.msra.mxu0 %v85
    %208 = vmatprep.subr.mxu0 0.0
    %209 = vmatpush1.msra.mxu0 %v86
    %210 = vmatprep.subr.mxu0 0.0
    %211 = vmatpush1.msra.mxu0 %v87
    %212 = vmatprep.subr.mxu0 0.0
    %213 = vmatpush1.msra.mxu0 %v88
    %214 = vmatprep.subr.mxu0 0.0
    %215 = vmatpush1.msra.mxu0 %v89
    %216 = vmatprep.subr.mxu0 0.0
    %217 = vmatpush1.msra.mxu0 %v90
    %218 = vmatprep.subr.mxu0 0.0
    %219 = vmatpush1.msra.mxu0 %v91
    %220 = vmatprep.subr.mxu0 0.0
    %221 = vmatpush1.msra.mxu0 %v92
    %222 = vmatprep.subr.mxu0 0.0
    %223 = vmatpush1.msra.mxu0 %v93
    %224 = vmatprep.subr.mxu0 0.0
    %225 = vmatpush1.msra.mxu0 %v94
    %226 = vmatprep.subr.mxu0 0.0
    %227 = vmatpush1.msra.mxu0 %v95
    %228 = vmatprep.subr.mxu0 0.0
    %229 = vmatpush1.msra.mxu0 %v96
    %230 = vmatprep.subr.mxu0 0.0
    %231 = vmatpush1.msra.mxu0 %v97
    %232 = vmatprep.subr.mxu0 0.0
    %233 = vmatpush1.msra.mxu0 %v98
    %234 = vmatprep.subr.mxu0 0.0
    %235 = vmatpush1.msra.mxu0 %v99
    %236 = vmatprep.subr.mxu0 0.0
    %237 = vmatpush1.msra.mxu0 %v100
    %238 = vmatprep.subr.mxu0 0.0
    %239 = vmatpush1.msra.mxu0 %v101
    %240 = vmatprep.subr.mxu0 0.0
    %241 = vmatpush1.msra.mxu0 %v102
    %242 = vmatprep.subr.mxu0 0.0
    %243 = vmatpush1.msra.mxu0 %v103
    %244 = vmatprep.mubr.f32.mxu0 %v107
    %245 = vmatmul.mubr.f32.gmra.mrb[0].mxu0 %v39
    %v246 = vpop.f32.mrb[0].mxu0
    %v247 = vadd.f32 %v177, %v246
    %v248 = vpop.f32.mrb[0].mxu0
    %249 = vdwg.mxu0
    %250 = vst [vmem:[#allocation7] sm:$0xf] %v247
    // Predicated region
    $region18: #{tpu_custom_call.1} parent=1 // pred_check
      _
    $region19: #{tpu_custom_call.1} parent=1 // pred_check_branch
      %252 = sbr.rel (0) target = $region21
    $region20: #{tpu_custom_call.1} parent=1 // pred_region
      %s254 = ssub.s32 64, 64
      %255 = vsyncadd [#allocation4], %s254
      %s257 = sshll.u32 [#allocation7], 4
      %s258 = int_to_ptr.vmem [resolvable:$true] %s257
      %260 = dma.vmem_to_hbm [thread:$0]  %s258, 64, %s2, [#allocation4]
    $region21: #{tpu_custom_call.1} parent=1 // pred_fallthru
      _
    // Predicated region
    $region22: #{tpu_custom_call.1} parent=1 // pred_check
      _
    $region23: #{tpu_custom_call.1} parent=1 // pred_check_branch
      %262 = sbr.rel (0) target = $region25
    $region24: #{tpu_custom_call.1} parent=1 // pred_region
      %263 = dma.done [#allocation4], 64
    $region25: #{tpu_custom_call.1} parent=1 // pred_fallthru
      _
    %264 = vsyncpa [#allocation3], 1
    %265 = vsyncpa [#allocation6], 1
    %266 = vsyncpa [#allocation4], 1

</llo_original>
